<compile_context>
chip_gen: v7x
topology: tpu7x:2x2x1
jax: 0.10.0
libtpu: 0.0.40
codegen_flags: <defaults>
</compile_context>

<pallas_src>
import jax
import jax.numpy as jnp
from jax.experimental import pallas as pl
from jax.experimental.pallas import tpu as pltpu

HIDDEN = 128   # fixed by the module definition
MAX_TB = 256   # batch-tile cap (sweep knob); multiple of 8, keeps VMEM tiny


def _round_up(x, m):
    return ((x + m - 1) // m) * m


def critic_kernel(x_ref,
                  w1_ref, b1_ref,
                  w2_ref, b2_ref,
                  w3_ref, b3_ref,
                  w4t_ref, b4_ref,
                  out_ref):
    x = x_ref[...]
    # Three MXU GEMMs with fused bias + ReLU (VPU ops overlap with MXU drain).
    h = jnp.maximum(
        jnp.dot(x, w1_ref[...], preferred_element_type=jnp.float32) + b1_ref[...], 0.0)
    h = jnp.maximum(
        jnp.dot(h, w2_ref[...], preferred_element_type=jnp.float32) + b2_ref[...], 0.0)
    h = jnp.maximum(
        jnp.dot(h, w3_ref[...], preferred_element_type=jnp.float32) + b3_ref[...], 0.0)
    # Final layer (128 -> 1): VPU multiply + lane reduction instead of an N=1
    # MXU matmul.
    out = jnp.sum(h * w4t_ref[...], axis=-1, keepdims=True) + b4_ref[...]
    out_ref[...] = out.astype(out_ref.dtype)


def critic_forward(obs, params):
    """obs: [B, in_dim] float32.
    params: w1..w3 stored [in_features, out_features], w4t stored [1, 128],
    biases b1..b3 [1,128], b4 [1,1]."""
    B, in_dim = obs.shape
    w1, b1 = params["w1"], params["b1"]
    w2, b2 = params["w2"], params["b2"]
    w3, b3 = params["w3"], params["b3"]
    w4t, b4 = params["w4t"], params["b4"]

    # --- pad the feature dim to a full 128-lane tile (zeros are inert) ---
    k_pad = _round_up(max(in_dim, HIDDEN), HIDDEN)
    if k_pad != in_dim:
        obs = jnp.pad(obs, ((0, 0), (0, k_pad - in_dim)))
        w1 = jnp.pad(w1, ((0, k_pad - in_dim), (0, 0)))

    # --- choose the batch tile and pad B to a multiple of it ---
    b8 = _round_up(B, 8)
    tb = min(MAX_TB, b8)
    b_pad = _round_up(b8, tb)
    if b_pad != B:
        obs = jnp.pad(obs, ((0, b_pad - B), (0, 0)))

    grid = (b_pad // tb,)

    def resident(shape):
        # Same block index every grid step -> DMA'd once, stays VMEM-resident.
        return pl.BlockSpec(shape, lambda i, _n=len(shape): (0,) * _n)

    out = pl.pallas_call(
        critic_kernel,
        out_shape=jax.ShapeDtypeStruct((b_pad, 1), jnp.float32),
        grid=grid,
        in_specs=[
            pl.BlockSpec((tb, k_pad), lambda i: (i, 0)),   # x: tiled over batch
            resident(w1.shape), resident(b1.shape),
            resident(w2.shape), resident(b2.shape),
            resident(w3.shape), resident(b3.shape),
            resident(w4t.shape), resident(b4.shape),
        ],
        out_specs=pl.BlockSpec((tb, 1), lambda i: (i, 0)),
        compiler_params=pltpu.CompilerParams(
            dimension_semantics=("parallel",)),   # megacore split on v7x
    )(obs, w1, b1, w2, b2, w3, b3, w4t, b4)

    return out[:B]


def init_params(key, in_dim):
    """Mimics PyTorch nn.Linear default init U(-1/sqrt(fan_in), 1/sqrt(fan_in)).
    w1..w3 are stored transposed as [in_features, out_features]; the last layer
    is stored as w4t [1, 128] (already transposed for the VPU reduce path)."""
    dims = [(in_dim, HIDDEN), (HIDDEN, HIDDEN), (HIDDEN, HIDDEN), (HIDDEN, 1)]
    params = {}
    for i, (fan_in, fan_out) in enumerate(dims, start=1):
        key, kw, kb = jax.random.split(key, 3)
        bound = 1.0 / jnp.sqrt(jnp.float32(fan_in))
        w = jax.random.uniform(kw, (fan_in, fan_out), jnp.float32,
                               minval=-bound, maxval=bound)
        b = jax.random.uniform(kb, (1, fan_out), jnp.float32,
                               minval=-bound, maxval=bound)
        if i == 4:
            params["w4t"] = w.T          # [1, 128]
            params["b4"] = b             # [1, 1]
        else:
            params[f"w{i}"] = w
            params[f"b{i}"] = b
    return params


def reference_forward(obs, params):
    """Pure-JAX reference of the PyTorch forward (no torch / no .cuda())."""
    h = jnp.maximum(obs @ params["w1"] + params["b1"], 0.0)
    h = jnp.maximum(h @ params["w2"] + params["b2"], 0.0)
    h = jnp.maximum(h @ params["w3"] + params["b3"], 0.0)
    return h @ params["w4t"].T + params["b4"]


if __name__ == "__main__":
    key = jax.random.PRNGKey(0)
    B, in_dim = 8, 32

    key, k_obs, k_params = jax.random.split(key, 3)
    obs = jax.random.normal(k_obs, (B, in_dim), jnp.float32)
    params = init_params(k_params, in_dim)

    out = critic_forward(obs, params)
    out = jax.block_until_ready(out)

    ref = reference_forward(obs, params)
    assert out.shape == (B, 1), out.shape
    assert jnp.allclose(out, ref, atol=1e-5, rtol=1e-5), (out, ref)

    print("KERNEL_OK")
</pallas_src>

<mosaic_0001>
module attributes {stable_mosaic.version = 11 : i64} {
  func.func @critic_kernel(%arg0: i32, %arg1: memref<8x128xf32, #tpu.memory_space<vmem>>, %arg2: memref<128x128xf32, #tpu.memory_space<vmem>>, %arg3: memref<1x128xf32, #tpu.memory_space<vmem>>, %arg4: memref<128x128xf32, #tpu.memory_space<vmem>>, %arg5: memref<1x128xf32, #tpu.memory_space<vmem>>, %arg6: memref<128x128xf32, #tpu.memory_space<vmem>>, %arg7: memref<1x128xf32, #tpu.memory_space<vmem>>, %arg8: memref<1x128xf32, #tpu.memory_space<vmem>>, %arg9: memref<1x1xf32, #tpu.memory_space<vmem>>, %arg10: memref<8x1xf32, #tpu.memory_space<vmem>>) attributes {dimension_semantics = [#tpu.dimension_semantics<parallel>], iteration_bounds = array<i64: 1>, scalar_prefetch = 0 : i64, scratch_operands = 0 : i64, tpu.core_type = #tpu.core_type<tc>, window_params = [{transform_indices = @transform_0, window_bounds = array<i64: 8, 128>}, {pipeline_mode = #tpu.pipeline_mode<synchronous>, transform_indices = @transform_1, window_bounds = array<i64: 128, 128>}, {pipeline_mode = #tpu.pipeline_mode<synchronous>, transform_indices = @transform_2, window_bounds = array<i64: 1, 128>}, {pipeline_mode = #tpu.pipeline_mode<synchronous>, transform_indices = @transform_3, window_bounds = array<i64: 128, 128>}, {pipeline_mode = #tpu.pipeline_mode<synchronous>, transform_indices = @transform_4, window_bounds = array<i64: 1, 128>}, {pipeline_mode = #tpu.pipeline_mode<synchronous>, transform_indices = @transform_5, window_bounds = array<i64: 128, 128>}, {pipeline_mode = #tpu.pipeline_mode<synchronous>, transform_indices = @transform_6, window_bounds = array<i64: 1, 128>}, {pipeline_mode = #tpu.pipeline_mode<synchronous>, transform_indices = @transform_7, window_bounds = array<i64: 1, 128>}, {pipeline_mode = #tpu.pipeline_mode<synchronous>, transform_indices = @transform_8, window_bounds = array<i64: 1, 1>}, {transform_indices = @transform_9, window_bounds = array<i64: 8, 1>}]} {
    %c0 = arith.constant 0 : index
    %c0_0 = arith.constant 0 : index
    %0 = vector.load %arg1[%c0, %c0_0] : memref<8x128xf32, #tpu.memory_space<vmem>>, vector<8x128xf32>
    %c0_1 = arith.constant 0 : index
    %c0_2 = arith.constant 0 : index
    %1 = vector.load %arg2[%c0_1, %c0_2] : memref<128x128xf32, #tpu.memory_space<vmem>>, vector<128x128xf32>
    %cst = arith.constant dense<0.000000e+00> : vector<8x128xf32>
    %2 = tpu.matmul %0, %1, %cst {dimension_numbers = #tpu.dot_dimension_numbers<[1], [0], [0], [1], [0, 0, 1, 1], [], []>} : vector<8x128xf32>, vector<128x128xf32>, vector<8x128xf32> -> vector<8x128xf32>
    %c0_3 = arith.constant 0 : index
    %c0_4 = arith.constant 0 : index
    %3 = vector.load %arg3[%c0_3, %c0_4] : memref<1x128xf32, #tpu.memory_space<vmem>>, vector<1x128xf32>
    %4 = vector.broadcast %3 : vector<1x128xf32> to vector<8x128xf32>
    %5 = arith.addf %2, %4 : vector<8x128xf32>
    %cst_5 = arith.constant 0.000000e+00 : f32
    %6 = vector.broadcast %cst_5 : f32 to vector<8x128xf32>
    %7 = arith.maximumf %5, %6 : vector<8x128xf32>
    %c0_6 = arith.constant 0 : index
    %c0_7 = arith.constant 0 : index
    %8 = vector.load %arg4[%c0_6, %c0_7] : memref<128x128xf32, #tpu.memory_space<vmem>>, vector<128x128xf32>
    %cst_8 = arith.constant dense<0.000000e+00> : vector<8x128xf32>
    %9 = tpu.matmul %7, %8, %cst_8 {dimension_numbers = #tpu.dot_dimension_numbers<[1], [0], [0], [1], [0, 0, 1, 1], [], []>} : vector<8x128xf32>, vector<128x128xf32>, vector<8x128xf32> -> vector<8x128xf32>
    %c0_9 = arith.constant 0 : index
    %c0_10 = arith.constant 0 : index
    %10 = vector.load %arg5[%c0_9, %c0_10] : memref<1x128xf32, #tpu.memory_space<vmem>>, vector<1x128xf32>
    %11 = vector.broadcast %10 : vector<1x128xf32> to vector<8x128xf32>
    %12 = arith.addf %9, %11 : vector<8x128xf32>
    %cst_11 = arith.constant 0.000000e+00 : f32
    %13 = vector.broadcast %cst_11 : f32 to vector<8x128xf32>
    %14 = arith.maximumf %12, %13 : vector<8x128xf32>
    %c0_12 = arith.constant 0 : index
    %c0_13 = arith.constant 0 : index
    %15 = vector.load %arg6[%c0_12, %c0_13] : memref<128x128xf32, #tpu.memory_space<vmem>>, vector<128x128xf32>
    %cst_14 = arith.constant dense<0.000000e+00> : vector<8x128xf32>
    %16 = tpu.matmul %14, %15, %cst_14 {dimension_numbers = #tpu.dot_dimension_numbers<[1], [0], [0], [1], [0, 0, 1, 1], [], []>} : vector<8x128xf32>, vector<128x128xf32>, vector<8x128xf32> -> vector<8x128xf32>
    %c0_15 = arith.constant 0 : index
    %c0_16 = arith.constant 0 : index
    %17 = vector.load %arg7[%c0_15, %c0_16] : memref<1x128xf32, #tpu.memory_space<vmem>>, vector<1x128xf32>
    %18 = vector.broadcast %17 : vector<1x128xf32> to vector<8x128xf32>
    %19 = arith.addf %16, %18 : vector<8x128xf32>
    %cst_17 = arith.constant 0.000000e+00 : f32
    %20 = vector.broadcast %cst_17 : f32 to vector<8x128xf32>
    %21 = arith.maximumf %19, %20 : vector<8x128xf32>
    %c0_18 = arith.constant 0 : index
    %c0_19 = arith.constant 0 : index
    %22 = vector.load %arg8[%c0_18, %c0_19] : memref<1x128xf32, #tpu.memory_space<vmem>>, vector<1x128xf32>
    %23 = vector.broadcast %22 : vector<1x128xf32> to vector<8x128xf32>
    %24 = arith.mulf %21, %23 : vector<8x128xf32>
    %cst_20 = arith.constant dense<0.000000e+00> : vector<8xf32>
    %25 = vector.multi_reduction <add>, %24, %cst_20 [1] : vector<8x128xf32> to vector<8xf32>
    %26 = vector.shape_cast %25 : vector<8xf32> to vector<8x1xf32>
    %c0_21 = arith.constant 0 : index
    %c0_22 = arith.constant 0 : index
    %27 = vector.load %arg9[%c0_21, %c0_22] : memref<1x1xf32, #tpu.memory_space<vmem>>, vector<1x1xf32>
    %28 = vector.broadcast %27 : vector<1x1xf32> to vector<8x1xf32>
    %29 = arith.addf %26, %28 : vector<8x1xf32>
    %c0_23 = arith.constant 0 : index
    %c0_24 = arith.constant 0 : index
    %30 = vector.load %arg10[%c0_23, %c0_24] : memref<8x1xf32, #tpu.memory_space<vmem>>, vector<8x1xf32>
    tpu.vector_store %arg10[%c0_23, %c0_24], %29 {strides = array<i32>} : memref<8x1xf32, #tpu.memory_space<vmem>>, vector<8x1xf32>,
    return
  }
  func.func @transform_0(%arg0: i32) -> (i32, i32) {
    %c0_i32 = arith.constant 0 : i32
    %c0_i32_0 = arith.constant 0 : i32
    return %arg0, %c0_i32 : i32, i32
  }
  func.func @transform_1(%arg0: i32) -> (i32, i32) {
    %c0_i32 = arith.constant 0 : i32
    %c0_i32_0 = arith.constant 0 : i32
    %c0_i32_1 = arith.constant 0 : i32
    return %c0_i32, %c0_i32_0 : i32, i32
  }
  func.func @transform_2(%arg0: i32) -> (i32, i32) {
    %c0_i32 = arith.constant 0 : i32
    %c0_i32_0 = arith.constant 0 : i32
    %c0_i32_1 = arith.constant 0 : i32
    return %c0_i32, %c0_i32_0 : i32, i32
  }
  func.func @transform_3(%arg0: i32) -> (i32, i32) {
    %c0_i32 = arith.constant 0 : i32
    %c0_i32_0 = arith.constant 0 : i32
    %c0_i32_1 = arith.constant 0 : i32
    return %c0_i32, %c0_i32_0 : i32, i32
  }
  func.func @transform_4(%arg0: i32) -> (i32, i32) {
    %c0_i32 = arith.constant 0 : i32
    %c0_i32_0 = arith.constant 0 : i32
    %c0_i32_1 = arith.constant 0 : i32
    return %c0_i32, %c0_i32_0 : i32, i32
  }
  func.func @transform_5(%arg0: i32) -> (i32, i32) {
    %c0_i32 = arith.constant 0 : i32
    %c0_i32_0 = arith.constant 0 : i32
    %c0_i32_1 = arith.constant 0 : i32
    return %c0_i32, %c0_i32_0 : i32, i32
  }
  func.func @transform_6(%arg0: i32) -> (i32, i32) {
    %c0_i32 = arith.constant 0 : i32
    %c0_i32_0 = arith.constant 0 : i32
    %c0_i32_1 = arith.constant 0 : i32
    return %c0_i32, %c0_i32_0 : i32, i32
  }
  func.func @transform_7(%arg0: i32) -> (i32, i32) {
    %c0_i32 = arith.constant 0 : i32
    %c0_i32_0 = arith.constant 0 : i32
    %c0_i32_1 = arith.constant 0 : i32
    return %c0_i32, %c0_i32_0 : i32, i32
  }
  func.func @transform_8(%arg0: i32) -> (i32, i32) {
    %c0_i32 = arith.constant 0 : i32
    %c0_i32_0 = arith.constant 0 : i32
    %c0_i32_1 = arith.constant 0 : i32
    return %c0_i32, %c0_i32_0 : i32, i32
  }
  func.func @transform_9(%arg0: i32) -> (i32, i32) {
    %c0_i32 = arith.constant 0 : i32
    %c0_i32_0 = arith.constant 0 : i32
    return %arg0, %c0_i32 : i32, i32
  }
}

</mosaic_0001>

<llo_original>
// kernel: tpu_custom_call.1
$region0: #{tpu_custom_call.1}
  #allocation0 [shape = 'u32[]', space=smem, size = 0x4, offset = 0x4, fixed_abs, tag = 'smem constant byte address 0x4 - core index']
  #allocation1 [shape = 'u32[144,128]{1,0:T(1,128)}', space=vmem, size = 0x12000, scoped, tag = 'internal scratch']
  #allocation2 [shape = 'f32[1,1]{1,0:T(1,128)S(1)}', space=vmem, size = 0x200, scoped, tag = 'scoped memory for tpu_custom_call.1']
  %s0 = inlined_call_operand.hbm [shape: f32[8,128], index: 0, kind: input, shape index: {}]
  %s1 = inlined_call_operand.hbm [shape: f32[128,128], index: 1, kind: input, shape index: {}]
  %s2 = inlined_call_operand.vmem [shape: f32[1,128], index: 2, kind: input, shape index: {}]
  %s3 = inlined_call_operand.hbm [shape: f32[128,128], index: 3, kind: input, shape index: {}]
  %s4 = inlined_call_operand.vmem [shape: f32[1,128], index: 4, kind: input, shape index: {}]
  %s5 = inlined_call_operand.hbm [shape: f32[128,128], index: 5, kind: input, shape index: {}]
  %s6 = inlined_call_operand.vmem [shape: f32[1,128], index: 6, kind: input, shape index: {}]
  %s7 = inlined_call_operand.vmem [shape: f32[1,128], index: 7, kind: input, shape index: {}]
  %s8 = inlined_call_operand.<no memory space> [shape: f32[1,1], index: 8, kind: input, shape index: {}]
  %s9 = inlined_call_operand.vmem [shape: f32[8,1], index: 9, kind: output, shape index: {}]
  %s10 = sld [smem:[#allocation0]]
  $region62: #{tpu_custom_call.1} parent=0
    _
  %s12 = ssub.s32 1, %s10
  %s13 = scalar_select 0, %s12, %s10
  %v14 = vstv %s8
  %15 = vst [vmem:[#allocation2] sm:$0x1] %v14
  $region1: #{tpu_custom_call.1} parent=0
    #allocation3 [shape = 'u8[4096]{0}', space=vmem, size = 0x1000, scoped, tag = 'input window, operand 0, single buffered']
    #allocation4 [shape = 's32[1]{0}', space=sflag, size = 0x4, scoped, tag = 'scoped memory for tpu_custom_call.1']
    #allocation5 [shape = 'u8[65536]{0}', space=vmem, size = 0x10000, scoped, tag = 'input window, operand 1, single buffered']
    #allocation6 [shape = 's32[1]{0}', space=sflag, size = 0x4, scoped, tag = 'scoped memory for tpu_custom_call.1']
    #allocation7 [shape = 'u8[65536]{0}', space=vmem, size = 0x10000, scoped, tag = 'input window, operand 3, single buffered']
    #allocation8 [shape = 'u8[65536]{0}', space=vmem, size = 0x10000, scoped, tag = 'input window, operand 5, single buffered']
    #allocation9 [shape = 's32[1]{0}', space=sflag, size = 0x4, scoped, tag = 'scoped memory for tpu_custom_call.1']
    %16 = vsyncpa [#allocation4], 0
    %17 = vsyncpa [#allocation6], 0
    %18 = vsyncpa [#allocation9], 0
    // Predicated region
    $region2: #{tpu_custom_call.1} parent=1 // pred_check
      _
    $region3: #{tpu_custom_call.1} parent=1 // pred_check_branch
      %20 = sbr.rel (0) target = $region5
    $region4: #{tpu_custom_call.1} parent=1 // pred_region
      %s22 = ssub.s32 128, 128
      %23 = vsyncadd [#allocation4], %s22
      %s25 = sshll.u32 [#allocation3], 4
      %s26 = int_to_ptr.vmem [resolvable:$true] %s25
      %28 = dma.hbm_to_vmem [thread:$0]  %s0, 128, %s26, [#allocation4]
    $region5: #{tpu_custom_call.1} parent=1 // pred_fallthru
      _
    // Predicated region
    $region6: #{tpu_custom_call.1} parent=1 // pred_check
      _
    $region7: #{tpu_custom_call.1} parent=1 // pred_check_branch
      %30 = sbr.rel (0) target = $region9
    $region8: #{tpu_custom_call.1} parent=1 // pred_region
      %s32 = ssub.s32 2048, 2048
      %33 = vsyncadd [#allocation6], %s32
      %s34 = sshll.u32 [#allocation5], 4
      %s35 = int_to_ptr.vmem [resolvable:$true] %s34
      %40 = dma.hbm_to_vmem [thread:$0]  %s1, 2048, %s35, [#allocation6], 128, 128, 8
    $region9: #{tpu_custom_call.1} parent=1 // pred_fallthru
      _
    // Predicated region
    $region10: #{tpu_custom_call.1} parent=1 // pred_check
      _
    $region11: #{tpu_custom_call.1} parent=1 // pred_check_branch
      %42 = sbr.rel (0) target = $region13
    $region12: #{tpu_custom_call.1} parent=1 // pred_region
      _
    $region13: #{tpu_custom_call.1} parent=1 // pred_fallthru
      _
    // Predicated region
    $region14: #{tpu_custom_call.1} parent=1 // pred_check
      _
    $region15: #{tpu_custom_call.1} parent=1 // pred_check_branch
      %44 = sbr.rel (0) target = $region17
    $region16: #{tpu_custom_call.1} parent=1 // pred_region
      %s46 = ssub.s32 2048, 2048
      %47 = vsyncadd [#allocation6], %s46
      %s48 = sshll.u32 [#allocation7], 4
      %s49 = int_to_ptr.vmem [resolvable:$true] %s48
      %54 = dma.hbm_to_vmem [thread:$0]  %s3, 2048, %s49, [#allocation6], 128, 128, 8
    $region17: #{tpu_custom_call.1} parent=1 // pred_fallthru
      _
    // Predicated region
    $region18: #{tpu_custom_call.1} parent=1 // pred_check
      _
    $region19: #{tpu_custom_call.1} parent=1 // pred_check_branch
      %56 = sbr.rel (0) target = $region21
    $region20: #{tpu_custom_call.1} parent=1 // pred_region
      _
    $region21: #{tpu_custom_call.1} parent=1 // pred_fallthru
      _
    // Predicated region
    $region22: #{tpu_custom_call.1} parent=1 // pred_check
      _
    $region23: #{tpu_custom_call.1} parent=1 // pred_check_branch
      %58 = sbr.rel (0) target = $region25
    $region24: #{tpu_custom_call.1} parent=1 // pred_region
      %s60 = ssub.s32 2048, 2048
      %61 = vsyncadd [#allocation9], %s60
      %s62 = sshll.u32 [#allocation8], 4
      %s63 = int_to_ptr.vmem [resolvable:$true] %s62
      %68 = dma.hbm_to_vmem [thread:$0]  %s5, 2048, %s63, [#allocation9], 128, 128, 8
    $region25: #{tpu_custom_call.1} parent=1 // pred_fallthru
      _
    // Predicated region
    $region26: #{tpu_custom_call.1} parent=1 // pred_check
      _
    $region27: #{tpu_custom_call.1} parent=1 // pred_check_branch
      %70 = sbr.rel (0) target = $region29
    $region28: #{tpu_custom_call.1} parent=1 // pred_region
      _
    $region29: #{tpu_custom_call.1} parent=1 // pred_fallthru
      _
    // Predicated region
    $region30: #{tpu_custom_call.1} parent=1 // pred_check
      _
    $region31: #{tpu_custom_call.1} parent=1 // pred_check_branch
      %72 = sbr.rel (0) target = $region33
    $region32: #{tpu_custom_call.1} parent=1 // pred_region
      _
    $region33: #{tpu_custom_call.1} parent=1 // pred_fallthru
      _
    // Predicated region
    $region34: #{tpu_custom_call.1} parent=1 // pred_check
      _
    $region35: #{tpu_custom_call.1} parent=1 // pred_check_branch
      %74 = sbr.rel (0) target = $region37
    $region36: #{tpu_custom_call.1} parent=1 // pred_region
      _
    $region37: #{tpu_custom_call.1} parent=1 // pred_fallthru
      _
    // Predicated region
    $region38: #{tpu_custom_call.1} parent=1 // pred_check
      _
    $region39: #{tpu_custom_call.1} parent=1 // pred_check_branch
      %76 = sbr.rel (0) target = $region41
    $region40: #{tpu_custom_call.1} parent=1 // pred_region
      %77 = dma.done [#allocation4], 128
    $region41: #{tpu_custom_call.1} parent=1 // pred_fallthru
      _
    // Predicated region
    $region42: #{tpu_custom_call.1} parent=1 // pred_check
      _
    $region43: #{tpu_custom_call.1} parent=1 // pred_check_branch
      %79 = sbr.rel (0) target = $region45
    $region44: #{tpu_custom_call.1} parent=1 // pred_region
      %80 = dma.done [#allocation6], 2048
    $region45: #{tpu_custom_call.1} parent=1 // pred_fallthru
      _
    // Predicated region
    $region46: #{tpu_custom_call.1} parent=1 // pred_check
      _
    $region47: #{tpu_custom_call.1} parent=1 // pred_check_branch
      %82 = sbr.rel (0) target = $region49
    $region48: #{tpu_custom_call.1} parent=1 // pred_region
      %83 = dma.done [#allocation6], 2048
    $region49: #{tpu_custom_call.1} parent=1 // pred_fallthru
      _
    // Predicated region
    $region50: #{tpu_custom_call.1} parent=1 // pred_check
      _
    $region51: #{tpu_custom_call.1} parent=1 // pred_check_branch
      %85 = sbr.rel (0) target = $region53
    $region52: #{tpu_custom_call.1} parent=1 // pred_region
      %86 = dma.done [#allocation9], 2048
    $region53: #{tpu_custom_call.1} parent=1 // pred_fallthru
      _
    %v87 = vld [vmem:[#allocation3] sm:$0xff]
    %v88 = vld [vmem:[#allocation5] sm:$0xff]
    %v89 = vld [vmem:[#allocation5 + $0x8] sm:$0xff]
    %v90 = vld [vmem:[#allocation5 + $0x10] sm:$0xff]
    %v91 = vld [vmem:[#allocation5 + $0x18] sm:$0xff]
    %v92 = vld [vmem:[#allocation5 + $0x20] sm:$0xff]
    %v93 = vld [vmem:[#allocation5 + $0x28] sm:$0xff]
    %v94 = vld [vmem:[#allocation5 + $0x30] sm:$0xff]
    %v95 = vld [vmem:[#allocation5 + $0x38] sm:$0xff]
    %v96 = vld [vmem:[#allocation5 + $0x40] sm:$0xff]
    %v97 = vld [vmem:[#allocation5 + $0x48] sm:$0xff]
    %v98 = vld [vmem:[#allocation5 + $0x50] sm:$0xff]
    %v99 = vld [vmem:[#allocation5 + $0x58] sm:$0xff]
    %v100 = vld [vmem:[#allocation5 + $0x60] sm:$0xff]
    %v101 = vld [vmem:[#allocation5 + $0x68] sm:$0xff]
    %v102 = vld [vmem:[#allocation5 + $0x70] sm:$0xff]
    %v103 = vld [vmem:[#allocation5 + $0x78] sm:$0xff]
    %v104 = vld [vmem:[%s2] sm:$0x1]
    %v106 = vlaneseq
    %v107 = vshrl.u32 %v106, 7
    %v108 = vsub.s32 0, %v107
    %v109 = vrot.slane %v104, %v108
    %111 = vmatprep.subr.mxu0 0.0
    %112 = vmatpush1.msra.mxu0 %v88
    %113 = vmatprep.subr.mxu0 0.0
    %114 = vmatpush1.msra.mxu0 %v89
    %115 = vmatprep.subr.mxu0 0.0
    %116 = vmatpush1.msra.mxu0 %v90
    %117 = vmatprep.subr.mxu0 0.0
    %118 = vmatpush1.msra.mxu0 %v91
    %119 = vmatprep.subr.mxu0 0.0
    %120 = vmatpush1.msra.mxu0 %v92
    %121 = vmatprep.subr.mxu0 0.0
    %122 = vmatpush1.msra.mxu0 %v93
    %123 = vmatprep.subr.mxu0 0.0
    %124 = vmatpush1.msra.mxu0 %v94
    %125 = vmatprep.subr.mxu0 0.0
    %126 = vmatpush1.msra.mxu0 %v95
    %127 = vmatprep.subr.mxu0 0.0
    %128 = vmatpush1.msra.mxu0 %v96
    %129 = vmatprep.subr.mxu0 0.0
    %130 = vmatpush1.msra.mxu0 %v97
    %131 = vmatprep.subr.mxu0 0.0
    %132 = vmatpush1.msra.mxu0 %v98
    %133 = vmatprep.subr.mxu0 0.0
    %134 = vmatpush1.msra.mxu0 %v99
    %135 = vmatprep.subr.mxu0 0.0
    %136 = vmatpush1.msra.mxu0 %v100
    %137 = vmatprep.subr.mxu0 0.0
    %138 = vmatpush1.msra.mxu0 %v101
    %139 = vmatprep.subr.mxu0 0.0
    %140 = vmatpush1.msra.mxu0 %v102
    %141 = vmatprep.subr.mxu0 0.0
    %142 = vmatpush1.msra.mxu0 %v103
    %143 = vmatprep.subr.mxu0 0.0
    %144 = vmatpush1.msra.mxu0 0.0
    %145 = vmatprep.subr.mxu0 0.0
    %146 = vmatpush1.msra.mxu0 0.0
    %147 = vmatprep.subr.mxu0 0.0
    %148 = vmatpush1.msra.mxu0 0.0
    %149 = vmatprep.subr.mxu0 0.0
    %150 = vmatpush1.msra.mxu0 0.0
    %151 = vmatprep.subr.mxu0 0.0
    %152 = vmatpush1.msra.mxu0 0.0
    %153 = vmatprep.subr.mxu0 0.0
    %154 = vmatpush1.msra.mxu0 0.0
    %155 = vmatprep.subr.mxu0 0.0
    %156 = vmatpush1.msra.mxu0 0.0
    %157 = vmatprep.subr.mxu0 0.0
    %158 = vmatpush1.msra.mxu0 0.0
    %159 = vmatprep.subr.mxu0 0.0
    %160 = vmatpush1.msra.mxu0 0.0
    %161 = vmatprep.subr.mxu0 0.0
    %162 = vmatpush1.msra.mxu0 0.0
    %163 = vmatprep.subr.mxu0 0.0
    %164 = vmatpush1.msra.mxu0 0.0
    %165 = vmatprep.subr.mxu0 0.0
    %166 = vmatpush1.msra.mxu0 0.0
    %167 = vmatprep.subr.mxu0 0.0
    %168 = vmatpush1.msra.mxu0 0.0
    %169 = vmatprep.subr.mxu0 0.0
    %170 = vmatpush1.msra.mxu0 0.0
    %171 = vmatprep.subr.mxu0 0.0
    %172 = vmatpush1.msra.mxu0 0.0
    %173 = vmatprep.subr.mxu0 0.0
    %174 = vmatpush1.msra.mxu0 0.0
    %175 = vmatprep.mubr.f32.mxu0 0.0
    %176 = vmatmul.mubr.f32.gmra.mrb[0].mxu0 %v87
    %v177 = vpop.f32.mrb[0].mxu0
    %v178 = vadd.f32 %v109, %v177
    %v179 = vpop.f32.mrb[0].mxu0
    %180 = vdwg.mxu0
    %v181 = vmax.f32 %v178, 0.0
    %v182 = vld [vmem:[#allocation7] sm:$0xff]
    %v183 = vld [vmem:[#allocation7 + $0x8] sm:$0xff]
    %v184 = vld [vmem:[#allocation7 + $0x10] sm:$0xff]
    %v185 = vld [vmem:[#allocation7 + $0x18] sm:$0xff]
    %v186 = vld [vmem:[#allocation7 + $0x20] sm:$0xff]
    %v187 = vld [vmem:[#allocation7 + $0x28] sm:$0xff]
    %v188 = vld [vmem:[#allocation7 + $0x30] sm:$0xff]
    %v189 = vld [vmem:[#allocation7 + $0x38] sm:$0xff]
    %v190 = vld [vmem:[#allocation7 + $0x40] sm:$0xff]
    %v191 = vld [vmem:[#allocation7 + $0x48] sm:$0xff]
    %v192 = vld [vmem:[#allocation7 + $0x50] sm:$0xff]
    %v193 = vld [vmem:[#allocation7 + $0x58] sm:$0xff]
    %v194 = vld [vmem:[#allocation7 + $0x60] sm:$0xff]
    %v195 = vld [vmem:[#allocation7 + $0x68] sm:$0xff]
    %v196 = vld [vmem:[#allocation7 + $0x70] sm:$0xff]
    %v197 = vld [vmem:[#allocation7 + $0x78] sm:$0xff]
    %v198 = vld [vmem:[%s4] sm:$0x1]
    %v200 = vlaneseq
    %v201 = vshrl.u32 %v200, 7
    %v202 = vsub.s32 0, %v201
    %v203 = vrot.slane %v198, %v202
    %205 = vmatprep.subr.mxu0 0.0
    %206 = vmatpush1.msra.mxu0 %v182
    %207 = vmatprep.subr.mxu0 0.0
    %208 = vmatpush1.msra.mxu0 %v183
    %209 = vmatprep.subr.mxu0 0.0
    %210 = vmatpush1.msra.mxu0 %v184
    %211 = vmatprep.subr.mxu0 0.0
    %212 = vmatpush1.msra.mxu0 %v185
    %213 = vmatprep.subr.mxu0 0.0
    %214 = vmatpush1.msra.mxu0 %v186
    %215 = vmatprep.subr.mxu0 0.0
    %216 = vmatpush1.msra.mxu0 %v187
    %217 = vmatprep.subr.mxu0 0.0
    %218 = vmatpush1.msra.mxu0 %v188
    %219 = vmatprep.subr.mxu0 0.0
    %220 = vmatpush1.msra.mxu0 %v189
    %221 = vmatprep.subr.mxu0 0.0
    %222 = vmatpush1.msra.mxu0 %v190
    %223 = vmatprep.subr.mxu0 0.0
    %224 = vmatpush1.msra.mxu0 %v191
    %225 = vmatprep.subr.mxu0 0.0
    %226 = vmatpush1.msra.mxu0 %v192
    %227 = vmatprep.subr.mxu0 0.0
    %228 = vmatpush1.msra.mxu0 %v193
    %229 = vmatprep.subr.mxu0 0.0
    %230 = vmatpush1.msra.mxu0 %v194
    %231 = vmatprep.subr.mxu0 0.0
    %232 = vmatpush1.msra.mxu0 %v195
    %233 = vmatprep.subr.mxu0 0.0
    %234 = vmatpush1.msra.mxu0 %v196
    %235 = vmatprep.subr.mxu0 0.0
    %236 = vmatpush1.msra.mxu0 %v197
    %237 = vmatprep.subr.mxu0 0.0
    %238 = vmatpush1.msra.mxu0 0.0
    %239 = vmatprep.subr.mxu0 0.0
    %240 = vmatpush1.msra.mxu0 0.0
    %241 = vmatprep.subr.mxu0 0.0
    %242 = vmatpush1.msra.mxu0 0.0
    %243 = vmatprep.subr.mxu0 0.0
    %244 = vmatpush1.msra.mxu0 0.0
    %245 = vmatprep.subr.mxu0 0.0
    %246 = vmatpush1.msra.mxu0 0.0
    %247 = vmatprep.subr.mxu0 0.0
    %248 = vmatpush1.msra.mxu0 0.0
    %249 = vmatprep.subr.mxu0 0.0
    %250 = vmatpush1.msra.mxu0 0.0
    %251 = vmatprep.subr.mxu0 0.0
    %252 = vmatpush1.msra.mxu0 0.0
    %253 = vmatprep.subr.mxu0 0.0
    %254 = vmatpush1.msra.mxu0 0.0
    %255 = vmatprep.subr.mxu0 0.0
    %256 = vmatpush1.msra.mxu0 0.0
    %257 = vmatprep.subr.mxu0 0.0
    %258 = vmatpush1.msra.mxu0 0.0
    %259 = vmatprep.subr.mxu0 0.0
    %260 = vmatpush1.msra.mxu0 0.0
    %261 = vmatprep.subr.mxu0 0.0
    %262 = vmatpush1.msra.mxu0 0.0
    %263 = vmatprep.subr.mxu0 0.0
    %264 = vmatpush1.msra.mxu0 0.0
    %265 = vmatprep.subr.mxu0 0.0
    %266 = vmatpush1.msra.mxu0 0.0
    %267 = vmatprep.subr.mxu0 0.0
    %268 = vmatpush1.msra.mxu0 0.0
    %269 = vmatprep.mubr.f32.mxu0 0.0
    %270 = vmatmul.mubr.f32.gmra.mrb[0].mxu0 %v181
    %v271 = vpop.f32.mrb[0].mxu0
    %v272 = vadd.f32 %v203, %v271
    %v273 = vpop.f32.mrb[0].mxu0
    %274 = vdwg.mxu0
    %v275 = vmax.f32 %v272, 0.0
    %v276 = vld [vmem:[#allocation8] sm:$0xff]
    %v277 = vld [vmem:[#allocation8 + $0x8] sm:$0xff]
    %v278 = vld [vmem:[#allocation8 + $0x10] sm:$0xff]
    %v279 = vld [vmem:[#allocation8 + $0x18] sm:$0xff]
    %v280 = vld [vmem:[#allocation8 + $0x20] sm:$0xff]
    %v281 = vld [vmem:[#allocation8 + $0x28] sm:$0xff]
    %v282 = vld [vmem:[#allocation8 + $0x30] sm:$0xff]
    %v283 = vld [vmem:[#allocation8 + $0x38] sm:$0xff]
    %v284 = vld [vmem:[#allocation8 + $0x40] sm:$0xff]
    %v285 = vld [vmem:[#allocation8 + $0x48] sm:$0xff]
    %v286 = vld [vmem:[#allocation8 + $0x50] sm:$0xff]
    %v287 = vld [vmem:[#allocation8 + $0x58] sm:$0xff]
    %v288 = vld [vmem:[#allocation8 + $0x60] sm:$0xff]
    %v289 = vld [vmem:[#allocation8 + $0x68] sm:$0xff]
    %v290 = vld [vmem:[#allocation8 + $0x70] sm:$0xff]
    %v291 = vld [vmem:[#allocation8 + $0x78] sm:$0xff]
    %v292 = vld [vmem:[%s6] sm:$0x1]
    %v294 = vlaneseq
    %v295 = vshrl.u32 %v294, 7
    %v296 = vsub.s32 0, %v295
    %v297 = vrot.slane %v292, %v296
    %299 = vmatprep.subr.mxu0 0.0
    %300 = vmatpush1.msra.mxu0 %v276
    %301 = vmatprep.subr.mxu0 0.0
    %302 = vmatpush1.msra.mxu0 %v277
    %303 = vmatprep.subr.mxu0 0.0
    %304 = vmatpush1.msra.mxu0 %v278
    %305 = vmatprep.subr.mxu0 0.0
    %306 = vmatpush1.msra.mxu0 %v279
    %307 = vmatprep.subr.mxu0 0.0
    %308 = vmatpush1.msra.mxu0 %v280
    %309 = vmatprep.subr.mxu0 0.0
    %310 = vmatpush1.msra.mxu0 %v281
    %311 = vmatprep.subr.mxu0 0.0
    %312 = vmatpush1.msra.mxu0 %v282
    %313 = vmatprep.subr.mxu0 0.0
    %314 = vmatpush1.msra.mxu0 %v283
    %315 = vmatprep.subr.mxu0 0.0
    %316 = vmatpush1.msra.mxu0 %v284
    %317 = vmatprep.subr.mxu0 0.0
    %318 = vmatpush1.msra.mxu0 %v285
    %319 = vmatprep.subr.mxu0 0.0
    %320 = vmatpush1.msra.mxu0 %v286
    %321 = vmatprep.subr.mxu0 0.0
    %322 = vmatpush1.msra.mxu0 %v287
    %323 = vmatprep.subr.mxu0 0.0
    %324 = vmatpush1.msra.mxu0 %v288
    %325 = vmatprep.subr.mxu0 0.0
    %326 = vmatpush1.msra.mxu0 %v289
    %327 = vmatprep.subr.mxu0 0.0
    %328 = vmatpush1.msra.mxu0 %v290
    %329 = vmatprep.subr.mxu0 0.0
    %330 = vmatpush1.msra.mxu0 %v291
    %331 = vmatprep.subr.mxu0 0.0
    %332 = vmatpush1.msra.mxu0 0.0
    %333 = vmatprep.subr.mxu0 0.0
    %334 = vmatpush1.msra.mxu0 0.0
    %335 = vmatprep.subr.mxu0 0.0
    %336 = vmatpush1.msra.mxu0 0.0
    %337 = vmatprep.subr.mxu0 0.0
    %338 = vmatpush1.msra.mxu0 0.0
    %339 = vmatprep.subr.mxu0 0.0
    %340 = vmatpush1.msra.mxu0 0.0
    %341 = vmatprep.subr.mxu0 0.0
    %342 = vmatpush1.msra.mxu0 0.0
    %343 = vmatprep.subr.mxu0 0.0
    %344 = vmatpush1.msra.mxu0 0.0
    %345 = vmatprep.subr.mxu0 0.0
    %346 = vmatpush1.msra.mxu0 0.0
    %347 = vmatprep.subr.mxu0 0.0
    %348 = vmatpush1.msra.mxu0 0.0
    %349 = vmatprep.subr.mxu0 0.0
    %350 = vmatpush1.msra.mxu0 0.0
    %351 = vmatprep.subr.mxu0 0.0
    %352 = vmatpush1.msra.mxu0 0.0
    %353 = vmatprep.subr.mxu0 0.0
    %354 = vmatpush1.msra.mxu0 0.0
    %355 = vmatprep.subr.mxu0 0.0
    %356 = vmatpush1.msra.mxu0 0.0
    %357 = vmatprep.subr.mxu0 0.0
    %358 = vmatpush1.msra.mxu0 0.0
    %359 = vmatprep.subr.mxu0 0.0
    %360 = vmatpush1.msra.mxu0 0.0
    %361 = vmatprep.subr.mxu0 0.0
    %362 = vmatpush1.msra.mxu0 0.0
    %363 = vmatprep.mubr.f32.mxu0 0.0
    %364 = vmatmul.mubr.f32.gmra.mrb[0].mxu0 %v275
    %v365 = vpop.f32.mrb[0].mxu0
    %v366 = vadd.f32 %v297, %v365
    %v367 = vpop.f32.mrb[0].mxu0
    %368 = vdwg.mxu0
    %v369 = vmax.f32 %v366, 0.0
    %v370 = vld [vmem:[%s7] sm:$0x1]
    %v372 = vlaneseq
    %v373 = vshrl.u32 %v372, 7
    %v374 = vsub.s32 0, %v373
    %v375 = vrot.slane %v370, %v374
    %v377 = vmul.f32 %v369, %v375
    %378 = vadd.xlane.f32.xlu0 %v377
    %v379 = vpop.xlane.xlu0 %378
    %v380 = vld [vmem:[#allocation2] sm:$0x1]
    %v382 = vlaneseq
    %v383 = vshrl.u32 %v382, 7
    %v384 = vsub.s32 0, %v383
    %v385 = vrot.slane %v380, %v384
    %v387 = vadd.f32 %v379, %v385
    %vm388 = vcmask 7168
    %389 = vst.msk [vmem:[%s9] sm:$0xff] %vm388, %v387
    // Predicated region
    $region54: #{tpu_custom_call.1} parent=1 // pred_check
      _
    $region55: #{tpu_custom_call.1} parent=1 // pred_check_branch
      %391 = sbr.rel (0) target = $region57
    $region56: #{tpu_custom_call.1} parent=1 // pred_region
      _
    $region57: #{tpu_custom_call.1} parent=1 // pred_fallthru
      _
    // Predicated region
    $region58: #{tpu_custom_call.1} parent=1 // pred_check
      _
    $region59: #{tpu_custom_call.1} parent=1 // pred_check_branch
      %393 = sbr.rel (0) target = $region61
    $region60: #{tpu_custom_call.1} parent=1 // pred_region
      _
    $region61: #{tpu_custom_call.1} parent=1 // pred_fallthru
      _
    %394 = vsyncpa [#allocation4], 1
    %395 = vsyncpa [#allocation6], 1
    %396 = vsyncpa [#allocation9], 1

</llo_original>
